<compile_context>
chip_gen: v5e
topology: v5e:2x2
jax: 0.10.0
libtpu: 0.0.40
codegen_flags: <defaults>
</compile_context>

<pallas_src>
import math

import jax
import jax.numpy as jnp
from jax.experimental import pallas as pl
from jax.experimental.pallas import tpu as pltpu


def _round_up(x, m):
    return ((x + m - 1) // m) * m


def _kernel_metric_kernel(scale_ref, feat_ref, w_ref, fsq_ref, wsq_ref,
                          logits_ref, km_ref):
    f = feat_ref[...]                                   # (TM, D), native dtype
    w = w_ref[...]                                      # (TN, D), native dtype

    # -2 * f @ w^T on the MXU: contract last dims of both operands, weights
    # stationary/untransposed. HIGHEST precision keeps f32 fidelity (matters
    # because of cancellation in the expanded-distance form).
    fw = jax.lax.dot_general(
        f, w,
        dimension_numbers=(((1,), (1,)), ((), ())),
        preferred_element_type=jnp.float32,
        precision=jax.lax.Precision.HIGHEST)            # (TM, TN)

    # Squared distance; (TM,1) + (1,TN) broadcasts are free on the VPU.
    # Clamp tiny negative rounding residue (true metric >= 0).
    metric = jnp.maximum(fsq_ref[...] + wsq_ref[...] - 2.0 * fw, 0.0)

    km = jnp.exp(metric * jnp.float32(-1.0 / 1.8))      # EUP exp
    km_ref[...] = km.astype(km_ref.dtype)
    logits_ref[...] = (scale_ref[0, 0] * km).astype(logits_ref.dtype)


def pure_kernel_metric_logits(feat, weights, label, *, class_num=None,
                              tm_max=128, tn_max=512):
    """Returns (train_logits, kernal_metric) like the PyTorch module."""
    B, D = feat.shape
    C, Dw = weights.shape
    assert D == Dw
    if class_num is None:
        class_num = C

    # ---- scalar pre-pass (plain JAX, O(B*D)): dynamic scale from the label
    #      distances.  Kept outside the grid so the big (B, C) outputs need
    #      only a single Pallas pass (2 writes, no re-read of km).
    lab = label.astype(jnp.int32)
    w_lab = jnp.take(weights, lab, axis=0).astype(jnp.float32)      # (B, D)
    d = feat.astype(jnp.float32) - w_lab
    label_km = jnp.exp(-jnp.sum(d * d, axis=-1) / 1.8)              # (B,)
    avg = jnp.maximum(jnp.mean(label_km), jnp.float32(0.5))
    scale = (jnp.log(jnp.float32(class_num - 1.0)) / avg).reshape(1, 1)

    # ---- tiling: pad batch to a multiple of 8 and classes to a multiple of
    #      128 (lane-dense output stores), tile over (B, C).
    tm = min(tm_max, _round_up(B, 8))
    tn = min(tn_max, _round_up(C, 128))
    B_pad = _round_up(B, tm)
    C_pad = _round_up(C, tn)
    feat_p = feat if B_pad == B else jnp.pad(feat, ((0, B_pad - B), (0, 0)))
    w_p = weights if C_pad == C else jnp.pad(weights, ((0, C_pad - C), (0, 0)))

    # ||f||^2 per batch row, f32, as a (B_pad, 1) column streamed per B-tile
    # (computed once, not re-reduced for every C-tile).
    f_p32 = feat_p.astype(jnp.float32)
    f_sq = jnp.sum(f_p32 * f_p32, axis=-1, keepdims=True)            # (B_pad, 1)

    # ||w||^2 per class, f32, as a lane-dense (1, C_pad) row reused by every
    # batch tile (avoids an in-kernel (TN,1)->(1,TN) relayout).
    w_p32 = w_p.astype(jnp.float32)
    w_sq = jnp.sum(w_p32 * w_p32, axis=-1)[None, :]                  # (1, C_pad)

    nbi, nbj = B_pad // tm, C_pad // tn
    # TODO(synk): for very large feature_dim (>~2K) add a third "arbitrary"
    # K axis with an f32 VMEM accumulator instead of loading full-D tiles.

    train_logits, kernal_metric = pl.pallas_call(
        _kernel_metric_kernel,
        out_shape=(
            jax.ShapeDtypeStruct((B_pad, C_pad), jnp.float32),
            jax.ShapeDtypeStruct((B_pad, C_pad), jnp.float32),
        ),
        grid=(nbi, nbj),
        in_specs=[
            pl.BlockSpec(memory_space=pltpu.SMEM),                    # scale (1,1)
            pl.BlockSpec((tm, D), lambda i, j: (i, 0)),               # feat tile
            pl.BlockSpec((tn, D), lambda i, j: (j, 0)),               # weight tile
            pl.BlockSpec((tm, 1), lambda i, j: (i, 0)),               # ||f||^2 col
            pl.BlockSpec((1, tn), lambda i, j: (0, j)),               # ||w||^2 row
        ],
        out_specs=(
            pl.BlockSpec((tm, tn), lambda i, j: (i, j)),
            pl.BlockSpec((tm, tn), lambda i, j: (i, j)),
        ),
        compiler_params=pltpu.CompilerParams(
            dimension_semantics=("parallel", "parallel"),
            vmem_limit_bytes=32 * 1024 * 1024,
        ),
    )(scale, feat_p, w_p, f_sq, w_sq)

    if (B_pad, C_pad) != (B, C):
        train_logits = train_logits[:B, :C]
        kernal_metric = kernal_metric[:B, :C]
    return train_logits, kernal_metric


def _xavier_uniform(key, shape, dtype=jnp.float32):
    # nn.init.xavier_uniform_ for (class_num, feature_dim): fan_in=feature_dim.
    fan_out, fan_in = shape
    bound = math.sqrt(6.0 / (fan_in + fan_out))
    return jax.random.uniform(key, shape, dtype, minval=-bound, maxval=bound)


if __name__ == "__main__":
    feature_dim = 32
    class_num = 16
    batch = 8

    key = jax.random.PRNGKey(0)
    k_feat, k_w, k_lab = jax.random.split(key, 3)

    feat = jax.random.normal(k_feat, (batch, feature_dim), dtype=jnp.float32)
    weights = _xavier_uniform(k_w, (class_num, feature_dim))
    label = jax.random.randint(k_lab, (batch,), 0, class_num, dtype=jnp.int32)

    train_logits, kernal_metric = pure_kernel_metric_logits(
        feat, weights, label, class_num=class_num)
    jax.block_until_ready((train_logits, kernal_metric))

    # Pure-JAX reference mirroring the PyTorch module.
    diff = weights[None, :, :] - feat[:, None, :]
    metric_ref = jnp.sum(diff * diff, axis=-1)
    km_ref = jnp.exp(-metric_ref / 1.8)
    cor = km_ref[jnp.arange(batch), label]
    avg_ref = jnp.maximum(jnp.mean(cor), 0.5)
    scale_ref = jnp.log(jnp.float32(class_num - 1.0)) / avg_ref
    logits_ref = scale_ref * km_ref

    assert jnp.allclose(kernal_metric, km_ref, atol=1e-4, rtol=1e-4)
    assert jnp.allclose(train_logits, logits_ref, atol=1e-4, rtol=1e-4)

    print("KERNEL_OK")
</pallas_src>

<mosaic_0001>
module attributes {stable_mosaic.version = 11 : i64} {
  func.func @_kernel_metric_kernel(%arg0: i32, %arg1: i32, %arg2: memref<1x1xf32, #tpu.memory_space<smem>>, %arg3: memref<8x32xf32, #tpu.memory_space<vmem>>, %arg4: memref<128x32xf32, #tpu.memory_space<vmem>>, %arg5: memref<8x1xf32, #tpu.memory_space<vmem>>, %arg6: memref<1x128xf32, #tpu.memory_space<vmem>>, %arg7: memref<8x128xf32, #tpu.memory_space<vmem>>, %arg8: memref<8x128xf32, #tpu.memory_space<vmem>>) attributes {dimension_semantics = [#tpu.dimension_semantics<parallel>, #tpu.dimension_semantics<parallel>], iteration_bounds = array<i64: 1, 1>, scalar_prefetch = 0 : i64, scratch_operands = 0 : i64, tpu.core_type = #tpu.core_type<tc>, window_params = [{transform_indices = @transform_0, window_bounds = array<i64: 1, 1>}, {transform_indices = @transform_1, window_bounds = array<i64: 8, 32>}, {transform_indices = @transform_2, window_bounds = array<i64: 128, 32>}, {transform_indices = @transform_3, window_bounds = array<i64: 8, 1>}, {transform_indices = @transform_4, window_bounds = array<i64: 1, 128>}, {transform_indices = @transform_5, window_bounds = array<i64: 8, 128>}, {transform_indices = @transform_6, window_bounds = array<i64: 8, 128>}]} {
    %c0 = arith.constant 0 : index
    %c0_0 = arith.constant 0 : index
    %0 = vector.load %arg3[%c0, %c0_0] : memref<8x32xf32, #tpu.memory_space<vmem>>, vector<8x32xf32>
    %c0_1 = arith.constant 0 : index
    %c0_2 = arith.constant 0 : index
    %1 = vector.load %arg4[%c0_1, %c0_2] : memref<128x32xf32, #tpu.memory_space<vmem>>, vector<128x32xf32>
    %cst = arith.constant dense<0.000000e+00> : vector<8x128xf32>
    %2 = tpu.matmul %0, %1, %cst {dimension_numbers = #tpu.dot_dimension_numbers<[1], [1], [0], [0], [0, 0, 1, 0], [], []>, precision = #tpu.contract_precision<fp32>} : vector<8x32xf32>, vector<128x32xf32>, vector<8x128xf32> -> vector<8x128xf32>
    %c0_3 = arith.constant 0 : index
    %c0_4 = arith.constant 0 : index
    %3 = vector.load %arg5[%c0_3, %c0_4] : memref<8x1xf32, #tpu.memory_space<vmem>>, vector<8x1xf32>
    %c0_5 = arith.constant 0 : index
    %c0_6 = arith.constant 0 : index
    %4 = vector.load %arg6[%c0_5, %c0_6] : memref<1x128xf32, #tpu.memory_space<vmem>>, vector<1x128xf32>
    %5 = vector.broadcast %3 : vector<8x1xf32> to vector<8x128xf32>
    %6 = vector.broadcast %4 : vector<1x128xf32> to vector<8x128xf32>
    %7 = arith.addf %5, %6 : vector<8x128xf32>
    %cst_7 = arith.constant 2.000000e+00 : f32
    %8 = vector.broadcast %cst_7 : f32 to vector<8x128xf32>
    %9 = arith.mulf %8, %2 : vector<8x128xf32>
    %10 = arith.subf %7, %9 : vector<8x128xf32>
    %cst_8 = arith.constant 0.000000e+00 : f32
    %11 = vector.broadcast %cst_8 : f32 to vector<8x128xf32>
    %12 = arith.maximumf %10, %11 : vector<8x128xf32>
    %cst_9 = arith.constant -0.555555582 : f32
    %13 = vector.broadcast %cst_9 : f32 to vector<8x128xf32>
    %14 = arith.mulf %12, %13 : vector<8x128xf32>
    %15 = math.exp %14 : vector<8x128xf32>
    %c0_10 = arith.constant 0 : index
    %c0_11 = arith.constant 0 : index
    %16 = vector.load %arg8[%c0_10, %c0_11] : memref<8x128xf32, #tpu.memory_space<vmem>>, vector<8x128xf32>
    tpu.vector_store %arg8[%c0_10, %c0_11], %15 {strides = array<i32>} : memref<8x128xf32, #tpu.memory_space<vmem>>, vector<8x128xf32>,
    %c0_12 = arith.constant 0 : index
    %c0_13 = arith.constant 0 : index
    %17 = memref.load %arg2[%c0_12, %c0_13] : memref<1x1xf32, #tpu.memory_space<smem>>
    %18 = vector.broadcast %17 : f32 to vector<8x128xf32>
    %19 = arith.mulf %18, %15 : vector<8x128xf32>
    %c0_14 = arith.constant 0 : index
    %c0_15 = arith.constant 0 : index
    %20 = vector.load %arg7[%c0_14, %c0_15] : memref<8x128xf32, #tpu.memory_space<vmem>>, vector<8x128xf32>
    tpu.vector_store %arg7[%c0_14, %c0_15], %19 {strides = array<i32>} : memref<8x128xf32, #tpu.memory_space<vmem>>, vector<8x128xf32>,
    return
  }
  func.func @transform_0(%arg0: i32, %arg1: i32) -> (i32, i32) {
    %c0_i32 = arith.constant 0 : i32
    %c0_i32_0 = arith.constant 0 : i32
    %c0_i32_1 = arith.constant 0 : i32
    return %c0_i32, %c0_i32_0 : i32, i32
  }
  func.func @transform_1(%arg0: i32, %arg1: i32) -> (i32, i32) {
    %c0_i32 = arith.constant 0 : i32
    %c0_i32_0 = arith.constant 0 : i32
    return %arg0, %c0_i32 : i32, i32
  }
  func.func @transform_2(%arg0: i32, %arg1: i32) -> (i32, i32) {
    %c0_i32 = arith.constant 0 : i32
    %c0_i32_0 = arith.constant 0 : i32
    return %arg1, %c0_i32 : i32, i32
  }
  func.func @transform_3(%arg0: i32, %arg1: i32) -> (i32, i32) {
    %c0_i32 = arith.constant 0 : i32
    %c0_i32_0 = arith.constant 0 : i32
    return %arg0, %c0_i32 : i32, i32
  }
  func.func @transform_4(%arg0: i32, %arg1: i32) -> (i32, i32) {
    %c0_i32 = arith.constant 0 : i32
    %c0_i32_0 = arith.constant 0 : i32
    return %c0_i32, %arg1 : i32, i32
  }
  func.func @transform_5(%arg0: i32, %arg1: i32) -> (i32, i32) {
    %c0_i32 = arith.constant 0 : i32
    return %arg0, %arg1 : i32, i32
  }
  func.func @transform_6(%arg0: i32, %arg1: i32) -> (i32, i32) {
    %c0_i32 = arith.constant 0 : i32
    return %arg0, %arg1 : i32, i32
  }
}

</mosaic_0001>

<llo_original>
// kernel: tpu_custom_call.1
$region0: #{tpu_custom_call.1}
  #allocation0 [shape = 'u32[]', space=smem, size = 0x4, offset = 0x4, fixed_abs, tag = 'smem constant byte address 0x4 - core index']
  #allocation1 [shape = 'u32[72,128]{1,0:T(1,128)}', space=vmem, size = 0x9000, scoped, tag = 'internal scratch']
  #allocation2 [shape = 'f32[1,1]{1,0:T(1,128)S(6)}', space=smem, size = 0x200, scoped, tag = 'scoped memory for tpu_custom_call.1']
  %s0 = inlined_call_operand.<no memory space> [shape: f32[1,1], index: 0, kind: input, shape index: {}]
  %s1 = inlined_call_operand.vmem [shape: f32[8,32], index: 1, kind: input, shape index: {}]
  %s2 = inlined_call_operand.vmem [shape: f32[128,32], index: 2, kind: input, shape index: {}]
  %s3 = inlined_call_operand.vmem [shape: f32[8,1], index: 3, kind: input, shape index: {}]
  %s4 = inlined_call_operand.vmem [shape: f32[1,128], index: 4, kind: input, shape index: {}]
  %s5 = inlined_call_operand.hbm [shape: f32[8,128], index: 5, kind: output, shape index: {0}]
  %s6 = inlined_call_operand.hbm [shape: f32[8,128], index: 6, kind: output, shape index: {1}]
  %7 = xla_tuple %s5, %s6
  %s8 = sld [smem:[#allocation0]]
  $region38: #{tpu_custom_call.1} parent=0
    _
  %s10 = ssub.s32 1, %s8
  %s11 = scalar_select 0, %s10, %s8
  %12 = sst [smem:[#allocation2]] %s0
  $region1: #{tpu_custom_call.1} parent=0
    #allocation3 [shape = 'u8[4096]{0}', space=vmem, size = 0x1000, scoped, tag = 'output window, operand 0, single buffered']
    #allocation4 [shape = 's32[1]{0}', space=sflag, size = 0x4, scoped, tag = 'scoped memory for tpu_custom_call.1']
    #allocation5 [shape = 'u8[4096]{0}', space=vmem, size = 0x1000, scoped, tag = 'output window, operand 1, single buffered']
    #allocation6 [shape = 's32[1]{0}', space=sflag, size = 0x4, scoped, tag = 'scoped memory for tpu_custom_call.1']
    %13 = vsyncpa [#allocation4], 0
    %14 = vsyncpa [#allocation6], 0
    // Predicated region
    $region2: #{tpu_custom_call.1} parent=1 // pred_check
      _
    $region3: #{tpu_custom_call.1} parent=1 // pred_check_branch
      %16 = sbr.rel (0) target = $region5
    $region4: #{tpu_custom_call.1} parent=1 // pred_region
      _
    $region5: #{tpu_custom_call.1} parent=1 // pred_fallthru
      _
    // Predicated region
    $region6: #{tpu_custom_call.1} parent=1 // pred_check
      _
    $region7: #{tpu_custom_call.1} parent=1 // pred_check_branch
      %18 = sbr.rel (0) target = $region9
    $region8: #{tpu_custom_call.1} parent=1 // pred_region
      _
    $region9: #{tpu_custom_call.1} parent=1 // pred_fallthru
      _
    // Predicated region
    $region10: #{tpu_custom_call.1} parent=1 // pred_check
      _
    $region11: #{tpu_custom_call.1} parent=1 // pred_check_branch
      %20 = sbr.rel (0) target = $region13
    $region12: #{tpu_custom_call.1} parent=1 // pred_region
      _
    $region13: #{tpu_custom_call.1} parent=1 // pred_fallthru
      _
    // Predicated region
    $region14: #{tpu_custom_call.1} parent=1 // pred_check
      _
    $region15: #{tpu_custom_call.1} parent=1 // pred_check_branch
      %22 = sbr.rel (0) target = $region17
    $region16: #{tpu_custom_call.1} parent=1 // pred_region
      _
    $region17: #{tpu_custom_call.1} parent=1 // pred_fallthru
      _
    // Predicated region
    $region18: #{tpu_custom_call.1} parent=1 // pred_check
      _
    $region19: #{tpu_custom_call.1} parent=1 // pred_check_branch
      %24 = sbr.rel (0) target = $region21
    $region20: #{tpu_custom_call.1} parent=1 // pred_region
      _
    $region21: #{tpu_custom_call.1} parent=1 // pred_fallthru
      _
    %v25 = vld [vmem:[%s1] sm:$0xff]
    %v26 = vld [vmem:[%s2] sm:$0xff]
    %v27 = vld [vmem:[%s2 + $0x8] sm:$0xff]
    %v28 = vld [vmem:[%s2 + $0x10] sm:$0xff]
    %v29 = vld [vmem:[%s2 + $0x18] sm:$0xff]
    %v30 = vld [vmem:[%s2 + $0x20] sm:$0xff]
    %v31 = vld [vmem:[%s2 + $0x28] sm:$0xff]
    %v32 = vld [vmem:[%s2 + $0x30] sm:$0xff]
    %v33 = vld [vmem:[%s2 + $0x38] sm:$0xff]
    %v34 = vld [vmem:[%s2 + $0x40] sm:$0xff]
    %v35 = vld [vmem:[%s2 + $0x48] sm:$0xff]
    %v36 = vld [vmem:[%s2 + $0x50] sm:$0xff]
    %v37 = vld [vmem:[%s2 + $0x58] sm:$0xff]
    %v38 = vld [vmem:[%s2 + $0x60] sm:$0xff]
    %v39 = vld [vmem:[%s2 + $0x68] sm:$0xff]
    %v40 = vld [vmem:[%s2 + $0x70] sm:$0xff]
    %v41 = vld [vmem:[%s2 + $0x78] sm:$0xff]
    %vm42 = vcmask 261120
    %v44 = vsel %vm42, %v25, 0
    %v47 = vsel %vm42, %v26, 0
    %v50 = vsel %vm42, %v27, 0
    %v53 = vsel %vm42, %v28, 0
    %v56 = vsel %vm42, %v29, 0
    %v59 = vsel %vm42, %v30, 0
    %v62 = vsel %vm42, %v31, 0
    %v65 = vsel %vm42, %v32, 0
    %v68 = vsel %vm42, %v33, 0
    %v71 = vsel %vm42, %v34, 0
    %v74 = vsel %vm42, %v35, 0
    %v77 = vsel %vm42, %v36, 0
    %v80 = vsel %vm42, %v37, 0
    %v83 = vsel %vm42, %v38, 0
    %v86 = vsel %vm42, %v39, 0
    %v89 = vsel %vm42, %v40, 0
    %v92 = vsel %vm42, %v41, 0
    %v94 = vand.u32 %v92, 4294901760
    %95 = vmatpush.xpose.msra.mxu0 %v94
    %v96 = vand.u32 %v89, 4294901760
    %97 = vmatpush.xpose.msra.mxu0 %v96
    %v98 = vand.u32 %v86, 4294901760
    %99 = vmatpush.xpose.msra.mxu0 %v98
    %v100 = vand.u32 %v83, 4294901760
    %101 = vmatpush.xpose.msra.mxu0 %v100
    %v102 = vand.u32 %v80, 4294901760
    %103 = vmatpush.xpose.msra.mxu0 %v102
    %v104 = vand.u32 %v77, 4294901760
    %105 = vmatpush.xpose.msra.mxu0 %v104
    %v106 = vand.u32 %v74, 4294901760
    %107 = vmatpush.xpose.msra.mxu0 %v106
    %v108 = vand.u32 %v71, 4294901760
    %109 = vmatpush.xpose.msra.mxu0 %v108
    %v110 = vand.u32 %v68, 4294901760
    %111 = vmatpush.xpose.msra.mxu0 %v110
    %v112 = vand.u32 %v65, 4294901760
    %113 = vmatpush.xpose.msra.mxu0 %v112
    %v114 = vand.u32 %v62, 4294901760
    %115 = vmatpush.xpose.msra.mxu0 %v114
    %v116 = vand.u32 %v59, 4294901760
    %117 = vmatpush.xpose.msra.mxu0 %v116
    %v118 = vand.u32 %v56, 4294901760
    %119 = vmatpush.xpose.msra.mxu0 %v118
    %v120 = vand.u32 %v53, 4294901760
    %121 = vmatpush.xpose.msra.mxu0 %v120
    %v122 = vand.u32 %v50, 4294901760
    %123 = vmatpush.xpose.msra.mxu0 %v122
    %v124 = vand.u32 %v47, 4294901760
    %125 = vmatpush.xpose.msra.mxu0 %v124
    %v126 = vand.u32 %v44, 4294901760
    %v127 = vsub.f32 %v44, %v126
    %v128 = vand.u32 %v127, 4294901760
    %v129 = vsub.f32 %v127, %v128
    %v130 = vand.u32 %v129, 4294901760
    %131 = vmatmul.f32.gmra.mxu0 %v130
    %v132 = vpop.f32.mrf.mxu0
    %v133 = vadd.f32 0.0, %v132
    %134 = vdwg.mxu0
    %v135 = vand.u32 %v92, 4294901760
    %v136 = vsub.f32 %v92, %v135
    %v137 = vand.u32 %v136, 4294901760
    %v138 = vsub.f32 %v136, %v137
    %v139 = vand.u32 %v138, 4294901760
    %140 = vmatpush.xpose.msra.mxu0 %v139
    %v141 = vand.u32 %v89, 4294901760
    %v142 = vsub.f32 %v89, %v141
    %v143 = vand.u32 %v142, 4294901760
    %v144 = vsub.f32 %v142, %v143
    %v145 = vand.u32 %v144, 4294901760
    %146 = vmatpush.xpose.msra.mxu0 %v145
    %v147 = vand.u32 %v86, 4294901760
    %v148 = vsub.f32 %v86, %v147
    %v149 = vand.u32 %v148, 4294901760
    %v150 = vsub.f32 %v148, %v149
    %v151 = vand.u32 %v150, 4294901760
    %152 = vmatpush.xpose.msra.mxu0 %v151
    %v153 = vand.u32 %v83, 4294901760
    %v154 = vsub.f32 %v83, %v153
    %v155 = vand.u32 %v154, 4294901760
    %v156 = vsub.f32 %v154, %v155
    %v157 = vand.u32 %v156, 4294901760
    %158 = vmatpush.xpose.msra.mxu0 %v157
    %v159 = vand.u32 %v80, 4294901760
    %v160 = vsub.f32 %v80, %v159
    %v161 = vand.u32 %v160, 4294901760
    %v162 = vsub.f32 %v160, %v161
    %v163 = vand.u32 %v162, 4294901760
    %164 = vmatpush.xpose.msra.mxu0 %v163
    %v165 = vand.u32 %v77, 4294901760
    %v166 = vsub.f32 %v77, %v165
    %v167 = vand.u32 %v166, 4294901760
    %v168 = vsub.f32 %v166, %v167
    %v169 = vand.u32 %v168, 4294901760
    %170 = vmatpush.xpose.msra.mxu0 %v169
    %v171 = vand.u32 %v74, 4294901760
    %v172 = vsub.f32 %v74, %v171
    %v173 = vand.u32 %v172, 4294901760
    %v174 = vsub.f32 %v172, %v173
    %v175 = vand.u32 %v174, 4294901760
    %176 = vmatpush.xpose.msra.mxu0 %v175
    %v177 = vand.u32 %v71, 4294901760
    %v178 = vsub.f32 %v71, %v177
    %v179 = vand.u32 %v178, 4294901760
    %v180 = vsub.f32 %v178, %v179
    %v181 = vand.u32 %v180, 4294901760
    %182 = vmatpush.xpose.msra.mxu0 %v181
    %v183 = vand.u32 %v68, 4294901760
    %v184 = vsub.f32 %v68, %v183
    %v185 = vand.u32 %v184, 4294901760
    %v186 = vsub.f32 %v184, %v185
    %v187 = vand.u32 %v186, 4294901760
    %188 = vmatpush.xpose.msra.mxu0 %v187
    %v189 = vand.u32 %v65, 4294901760
    %v190 = vsub.f32 %v65, %v189
    %v191 = vand.u32 %v190, 4294901760
    %v192 = vsub.f32 %v190, %v191
    %v193 = vand.u32 %v192, 4294901760
    %194 = vmatpush.xpose.msra.mxu0 %v193
    %v195 = vand.u32 %v62, 4294901760
    %v196 = vsub.f32 %v62, %v195
    %v197 = vand.u32 %v196, 4294901760
    %v198 = vsub.f32 %v196, %v197
    %v199 = vand.u32 %v198, 4294901760
    %200 = vmatpush.xpose.msra.mxu0 %v199
    %v201 = vand.u32 %v59, 4294901760
    %v202 = vsub.f32 %v59, %v201
    %v203 = vand.u32 %v202, 4294901760
    %v204 = vsub.f32 %v202, %v203
    %v205 = vand.u32 %v204, 4294901760
    %206 = vmatpush.xpose.msra.mxu0 %v205
    %v207 = vand.u32 %v56, 4294901760
    %v208 = vsub.f32 %v56, %v207
    %v209 = vand.u32 %v208, 4294901760
    %v210 = vsub.f32 %v208, %v209
    %v211 = vand.u32 %v210, 4294901760
    %212 = vmatpush.xpose.msra.mxu0 %v211
    %v213 = vand.u32 %v53, 4294901760
    %v214 = vsub.f32 %v53, %v213
    %v215 = vand.u32 %v214, 4294901760
    %v216 = vsub.f32 %v214, %v215
    %v217 = vand.u32 %v216, 4294901760
    %218 = vmatpush.xpose.msra.mxu0 %v217
    %v219 = vand.u32 %v50, 4294901760
    %v220 = vsub.f32 %v50, %v219
    %v221 = vand.u32 %v220, 4294901760
    %v222 = vsub.f32 %v220, %v221
    %v223 = vand.u32 %v222, 4294901760
    %224 = vmatpush.xpose.msra.mxu0 %v223
    %v225 = vand.u32 %v47, 4294901760
    %v226 = vsub.f32 %v47, %v225
    %v227 = vand.u32 %v226, 4294901760
    %v228 = vsub.f32 %v226, %v227
    %v229 = vand.u32 %v228, 4294901760
    %230 = vmatpush.xpose.msra.mxu0 %v229
    %v231 = vand.u32 %v44, 4294901760
    %232 = vmatmul.f32.gmra.mxu0 %v231
    %v233 = vpop.f32.mrf.mxu0
    %v234 = vadd.f32 %v133, %v233
    %235 = vdwg.mxu0
    %v236 = vand.u32 %v92, 4294901760
    %v237 = vsub.f32 %v92, %v236
    %238 = vmatpush.xpose.msra.mxu0 %v237
    %v239 = vand.u32 %v89, 4294901760
    %v240 = vsub.f32 %v89, %v239
    %241 = vmatpush.xpose.msra.mxu0 %v240
    %v242 = vand.u32 %v86, 4294901760
    %v243 = vsub.f32 %v86, %v242
    %244 = vmatpush.xpose.msra.mxu0 %v243
    %v245 = vand.u32 %v83, 4294901760
    %v246 = vsub.f32 %v83, %v245
    %247 = vmatpush.xpose.msra.mxu0 %v246
    %v248 = vand.u32 %v80, 4294901760
    %v249 = vsub.f32 %v80, %v248
    %250 = vmatpush.xpose.msra.mxu0 %v249
    %v251 = vand.u32 %v77, 4294901760
    %v252 = vsub.f32 %v77, %v251
    %253 = vmatpush.xpose.msra.mxu0 %v252
    %v254 = vand.u32 %v74, 4294901760
    %v255 = vsub.f32 %v74, %v254
    %256 = vmatpush.xpose.msra.mxu0 %v255
    %v257 = vand.u32 %v71, 4294901760
    %v258 = vsub.f32 %v71, %v257
    %259 = vmatpush.xpose.msra.mxu0 %v258
    %v260 = vand.u32 %v68, 4294901760
    %v261 = vsub.f32 %v68, %v260
    %262 = vmatpush.xpose.msra.mxu0 %v261
    %v263 = vand.u32 %v65, 4294901760
    %v264 = vsub.f32 %v65, %v263
    %265 = vmatpush.xpose.msra.mxu0 %v264
    %v266 = vand.u32 %v62, 4294901760
    %v267 = vsub.f32 %v62, %v266
    %268 = vmatpush.xpose.msra.mxu0 %v267
    %v269 = vand.u32 %v59, 4294901760
    %v270 = vsub.f32 %v59, %v269
    %271 = vmatpush.xpose.msra.mxu0 %v270
    %v272 = vand.u32 %v56, 4294901760
    %v273 = vsub.f32 %v56, %v272
    %274 = vmatpush.xpose.msra.mxu0 %v273
    %v275 = vand.u32 %v53, 4294901760
    %v276 = vsub.f32 %v53, %v275
    %277 = vmatpush.xpose.msra.mxu0 %v276
    %v278 = vand.u32 %v50, 4294901760
    %v279 = vsub.f32 %v50, %v278
    %280 = vmatpush.xpose.msra.mxu0 %v279
    %v281 = vand.u32 %v47, 4294901760
    %v282 = vsub.f32 %v47, %v281
    %283 = vmatpush.xpose.msra.mxu0 %v282
    %v284 = vand.u32 %v44, 4294901760
    %v285 = vsub.f32 %v44, %v284
    %286 = vmatmul.f32.gmra.mxu0 %v285
    %v287 = vpop.f32.mrf.mxu0
    %v288 = vadd.f32 %v234, %v287
    %289 = vdwg.mxu0
    %v290 = vand.u32 %v92, 4294901760
    %291 = vmatpush.xpose.msra.mxu0 %v290
    %v292 = vand.u32 %v89, 4294901760
    %293 = vmatpush.xpose.msra.mxu0 %v292
    %v294 = vand.u32 %v86, 4294901760
    %295 = vmatpush.xpose.msra.mxu0 %v294
    %v296 = vand.u32 %v83, 4294901760
    %297 = vmatpush.xpose.msra.mxu0 %v296
    %v298 = vand.u32 %v80, 4294901760
    %299 = vmatpush.xpose.msra.mxu0 %v298
    %v300 = vand.u32 %v77, 4294901760
    %301 = vmatpush.xpose.msra.mxu0 %v300
    %v302 = vand.u32 %v74, 4294901760
    %303 = vmatpush.xpose.msra.mxu0 %v302
    %v304 = vand.u32 %v71, 4294901760
    %305 = vmatpush.xpose.msra.mxu0 %v304
    %v306 = vand.u32 %v68, 4294901760
    %307 = vmatpush.xpose.msra.mxu0 %v306
    %v308 = vand.u32 %v65, 4294901760
    %309 = vmatpush.xpose.msra.mxu0 %v308
    %v310 = vand.u32 %v62, 4294901760
    %311 = vmatpush.xpose.msra.mxu0 %v310
    %v312 = vand.u32 %v59, 4294901760
    %313 = vmatpush.xpose.msra.mxu0 %v312
    %v314 = vand.u32 %v56, 4294901760
    %315 = vmatpush.xpose.msra.mxu0 %v314
    %v316 = vand.u32 %v53, 4294901760
    %317 = vmatpush.xpose.msra.mxu0 %v316
    %v318 = vand.u32 %v50, 4294901760
    %319 = vmatpush.xpose.msra.mxu0 %v318
    %v320 = vand.u32 %v47, 4294901760
    %321 = vmatpush.xpose.msra.mxu0 %v320
    %v322 = vand.u32 %v44, 4294901760
    %v323 = vsub.f32 %v44, %v322
    %v324 = vand.u32 %v323, 4294901760
    %325 = vmatmul.f32.gmra.mxu0 %v324
    %v326 = vpop.f32.mrf.mxu0
    %v327 = vadd.f32 %v288, %v326
    %328 = vdwg.mxu0
    %v329 = vand.u32 %v92, 4294901760
    %v330 = vsub.f32 %v92, %v329
    %v331 = vand.u32 %v330, 4294901760
    %332 = vmatpush.xpose.msra.mxu0 %v331
    %v333 = vand.u32 %v89, 4294901760
    %v334 = vsub.f32 %v89, %v333
    %v335 = vand.u32 %v334, 4294901760
    %336 = vmatpush.xpose.msra.mxu0 %v335
    %v337 = vand.u32 %v86, 4294901760
    %v338 = vsub.f32 %v86, %v337
    %v339 = vand.u32 %v338, 4294901760
    %340 = vmatpush.xpose.msra.mxu0 %v339
    %v341 = vand.u32 %v83, 4294901760
    %v342 = vsub.f32 %v83, %v341
    %v343 = vand.u32 %v342, 4294901760
    %344 = vmatpush.xpose.msra.mxu0 %v343
    %v345 = vand.u32 %v80, 4294901760
    %v346 = vsub.f32 %v80, %v345
    %v347 = vand.u32 %v346, 4294901760
    %348 = vmatpush.xpose.msra.mxu0 %v347
    %v349 = vand.u32 %v77, 4294901760
    %v350 = vsub.f32 %v77, %v349
    %v351 = vand.u32 %v350, 4294901760
    %352 = vmatpush.xpose.msra.mxu0 %v351
    %v353 = vand.u32 %v74, 4294901760
    %v354 = vsub.f32 %v74, %v353
    %v355 = vand.u32 %v354, 4294901760
    %356 = vmatpush.xpose.msra.mxu0 %v355
    %v357 = vand.u32 %v71, 4294901760
    %v358 = vsub.f32 %v71, %v357
    %v359 = vand.u32 %v358, 4294901760
    %360 = vmatpush.xpose.msra.mxu0 %v359
    %v361 = vand.u32 %v68, 4294901760
    %v362 = vsub.f32 %v68, %v361
    %v363 = vand.u32 %v362, 4294901760
    %364 = vmatpush.xpose.msra.mxu0 %v363
    %v365 = vand.u32 %v65, 4294901760
    %v366 = vsub.f32 %v65, %v365
    %v367 = vand.u32 %v366, 4294901760
    %368 = vmatpush.xpose.msra.mxu0 %v367
    %v369 = vand.u32 %v62, 4294901760
    %v370 = vsub.f32 %v62, %v369
    %v371 = vand.u32 %v370, 4294901760
    %372 = vmatpush.xpose.msra.mxu0 %v371
    %v373 = vand.u32 %v59, 4294901760
    %v374 = vsub.f32 %v59, %v373
    %v375 = vand.u32 %v374, 4294901760
    %376 = vmatpush.xpose.msra.mxu0 %v375
    %v377 = vand.u32 %v56, 4294901760
    %v378 = vsub.f32 %v56, %v377
    %v379 = vand.u32 %v378, 4294901760
    %380 = vmatpush.xpose.msra.mxu0 %v379
    %v381 = vand.u32 %v53, 4294901760
    %v382 = vsub.f32 %v53, %v381
    %v383 = vand.u32 %v382, 4294901760
    %384 = vmatpush.xpose.msra.mxu0 %v383
    %v385 = vand.u32 %v50, 4294901760
    %v386 = vsub.f32 %v50, %v385
    %v387 = vand.u32 %v386, 4294901760
    %388 = vmatpush.xpose.msra.mxu0 %v387
    %v389 = vand.u32 %v47, 4294901760
    %v390 = vsub.f32 %v47, %v389
    %v391 = vand.u32 %v390, 4294901760
    %392 = vmatpush.xpose.msra.mxu0 %v391
    %v393 = vand.u32 %v44, 4294901760
    %394 = vmatmul.f32.gmra.mxu0 %v393
    %v395 = vpop.f32.mrf.mxu0
    %v396 = vadd.f32 %v327, %v395
    %397 = vdwg.mxu0
    %v398 = vand.u32 %v92, 4294901760
    %399 = vmatpush.xpose.msra.mxu0 %v398
    %v400 = vand.u32 %v89, 4294901760
    %401 = vmatpush.xpose.msra.mxu0 %v400
    %v402 = vand.u32 %v86, 4294901760
    %403 = vmatpush.xpose.msra.mxu0 %v402
    %v404 = vand.u32 %v83, 4294901760
    %405 = vmatpush.xpose.msra.mxu0 %v404
    %v406 = vand.u32 %v80, 4294901760
    %407 = vmatpush.xpose.msra.mxu0 %v406
    %v408 = vand.u32 %v77, 4294901760
    %409 = vmatpush.xpose.msra.mxu0 %v408
    %v410 = vand.u32 %v74, 4294901760
    %411 = vmatpush.xpose.msra.mxu0 %v410
    %v412 = vand.u32 %v71, 4294901760
    %413 = vmatpush.xpose.msra.mxu0 %v412
    %v414 = vand.u32 %v68, 4294901760
    %415 = vmatpush.xpose.msra.mxu0 %v414
    %v416 = vand.u32 %v65, 4294901760
    %417 = vmatpush.xpose.msra.mxu0 %v416
    %v418 = vand.u32 %v62, 4294901760
    %419 = vmatpush.xpose.msra.mxu0 %v418
    %v420 = vand.u32 %v59, 4294901760
    %421 = vmatpush.xpose.msra.mxu0 %v420
    %v422 = vand.u32 %v56, 4294901760
    %423 = vmatpush.xpose.msra.mxu0 %v422
    %v424 = vand.u32 %v53, 4294901760
    %425 = vmatpush.xpose.msra.mxu0 %v424
    %v426 = vand.u32 %v50, 4294901760
    %427 = vmatpush.xpose.msra.mxu0 %v426
    %v428 = vand.u32 %v47, 4294901760
    %429 = vmatpush.xpose.msra.mxu0 %v428
    %v430 = vand.u32 %v44, 4294901760
    %431 = vmatmul.f32.gmra.mxu0 %v430
    %v432 = vpop.f32.mrf.mxu0
    %v433 = vadd.f32 %v396, %v432
    %434 = vdwg.mxu0
    %v435 = vld [vmem:[%s3] sm:$0xff]
    %v436 = vld [vmem:[%s4] sm:$0x1]
    %438 = vset.pattern.permute.xlu0 0
    %439 = vperm.xlu0 %438, %v435
    %v440 = vpop.permute.xlu0 %439
    %v443 = vperm.slane %v436, 0
    %v445 = vadd.f32 %v440, %v443
    %v446 = vmul.f32 %v433, 2.0
    %v447 = vsub.f32 %v445, %v446
    %v448 = vmax.f32 %v447, 0.0
    %v449 = vmul.f32 %v448, -0.5555556
    %v450 = vmul.f32 %v449, 1.442695
    %v451 = vpow.pop %v450
    %452 = vst [vmem:[#allocation5] sm:$0xff] %v451
    %s453 = sld [smem:[#allocation2]]
    %v454 = vstv %s453
    %v455 = vmul.f32 %v454, %v451
    %456 = vst [vmem:[#allocation3] sm:$0xff] %v455
    // Predicated region
    $region22: #{tpu_custom_call.1} parent=1 // pred_check
      _
    $region23: #{tpu_custom_call.1} parent=1 // pred_check_branch
      %458 = sbr.rel (0) target = $region25
    $region24: #{tpu_custom_call.1} parent=1 // pred_region
      %460 = vsyncadd [#allocation4], 0
      %s462 = sshll.u32 [#allocation3], 4
      %s463 = int_to_ptr.vmem [resolvable:$true] %s462
      %s464 = sshll.u32 %s5, 4
      %s465 = int_to_ptr.hbm [resolvable:$true] %s464
      %467 = dma.vmem_to_hbm [thread:$0]  %s463, 128, %s465, [#allocation4]
    $region25: #{tpu_custom_call.1} parent=1 // pred_fallthru
      _
    // Predicated region
    $region26: #{tpu_custom_call.1} parent=1 // pred_check
      _
    $region27: #{tpu_custom_call.1} parent=1 // pred_check_branch
      %469 = sbr.rel (0) target = $region29
    $region28: #{tpu_custom_call.1} parent=1 // pred_region
      %471 = vsyncadd [#allocation6], 0
      %s473 = sshll.u32 [#allocation5], 4
      %s474 = int_to_ptr.vmem [resolvable:$true] %s473
      %s475 = sshll.u32 %s6, 4
      %s476 = int_to_ptr.hbm [resolvable:$true] %s475
      %478 = dma.vmem_to_hbm [thread:$0]  %s474, 128, %s476, [#allocation6]
    $region29: #{tpu_custom_call.1} parent=1 // pred_fallthru
      _
    // Predicated region
    $region30: #{tpu_custom_call.1} parent=1 // pred_check
      _
    $region31: #{tpu_custom_call.1} parent=1 // pred_check_branch
      %480 = sbr.rel (0) target = $region33
    $region32: #{tpu_custom_call.1} parent=1 // pred_region
      %482 = dma.done [#allocation4], 128
    $region33: #{tpu_custom_call.1} parent=1 // pred_fallthru
      _
    // Predicated region
    $region34: #{tpu_custom_call.1} parent=1 // pred_check
      _
    $region35: #{tpu_custom_call.1} parent=1 // pred_check_branch
      %484 = sbr.rel (0) target = $region37
    $region36: #{tpu_custom_call.1} parent=1 // pred_region
      %486 = dma.done [#allocation6], 128
    $region37: #{tpu_custom_call.1} parent=1 // pred_fallthru
      _
    %487 = vsyncpa [#allocation4], 1
    %488 = vsyncpa [#allocation6], 1

</llo_original>
